<compile_context>
chip_gen: v7x
topology: tpu7x:2x2x1
jax: 0.10.0
libtpu: 0.0.40
codegen_flags: <defaults>
</compile_context>

<pallas_src>
import functools

import jax
import jax.numpy as jnp
from jax.experimental import pallas as pl
from jax.experimental.pallas import tpu as pltpu


def layernorm_kernel(x_ref, scale_ref, shift_ref, o_ref, *, eps, inv_d, n_pad):
    x = x_ref[...].astype(jnp.float32)                         # (tm, D_pad)
    # Mean: padded lanes are zero, so sum(x) is exact; divide by the true D.
    mean = jnp.sum(x, axis=-1, keepdims=True) * inv_d           # (tm, 1)
    centered = x - mean
    # Two-pass variance (robust vs E[x^2]-E[x]^2 cancellation).  Each padded lane
    # contributes exactly (0 - mean)^2 = mean^2; subtract that analytically.
    ssq = jnp.sum(centered * centered, axis=-1, keepdims=True)  # (tm, 1)
    if n_pad:
        ssq = ssq - n_pad * (mean * mean)
    var = jnp.maximum(ssq * inv_d, 0.0)                         # unbiased=False
    inv_std = jax.lax.rsqrt(var + eps)                          # EUP op (free slot)
    # (1, D_pad) f32 params broadcast along sublanes inside the arithmetic.
    y = centered * inv_std * scale_ref[...] + shift_ref[...]
    o_ref[...] = y.astype(o_ref.dtype)


def _vmem_limit_bytes():
    # Generation-aware scoped-VMEM limit: ~60% of physical per-core VMEM, capped at
    # 64 MiB.  v7x (64 MiB physical) -> ~38 MiB; v5e/v6e (128 MiB) -> 64 MiB.
    cap = 128 * 1024 * 1024
    try:
        info = pltpu.get_tpu_info()
        cap = int(getattr(info, "vmem_capacity_bytes", cap))
    except Exception:
        pass
    return min(64 * 1024 * 1024, int(cap * 0.6))


def _choose_row_block(rows, d_pad, itemsize, vmem_limit):
    # Sublane alignment: 8 rows for 4-byte dtypes, 16 for 2-byte (bf16 packing).
    align = 16 if itemsize == 2 else 8
    if rows <= align:
        # Tiny input: single full-extent block (block dim == array dim is legal).
        return int(rows)
    # (a) Per HBM<->VMEM buffer target ~4 MiB: near the roofline plateau, keeps the
    #     ~0.35 us per-step overhead small, and leaves many grid steps for pipelining.
    per_buf_cap = (4 * 1024 * 1024) // max(d_pad * itemsize, 1)
    # (b) Total pipeline footprint: 2x double-buffered input + 2x output blocks plus
    #     ~3 f32 working arrays (x_f32, centered, y) live in the traced body.
    bytes_per_row = d_pad * (2 * itemsize + 2 * itemsize + 3 * 4)
    total_cap = int(0.6 * vmem_limit) // max(bytes_per_row, 1)
    rb = max(align, min(per_buf_cap, total_cap))
    # (c) Never collapse to a 1-2 step grid: keep >= ~8 steps so double-buffering has
    #     something to overlap and v7x's two TensorCores each get several steps.
    min_steps = 8
    rb = min(rb, max(align, pl.cdiv(rows, min_steps)))
    rb = max(align, (rb // align) * align)
    return int(rb)


def layer_norm(x, scale, shift, eps=1e-5, row_block=None):
    orig_shape = x.shape
    d = orig_shape[-1]
    x2 = x.reshape(-1, d)                      # free (no copy) for contiguous inputs
    rows = x2.shape[0]
    itemsize = x2.dtype.itemsize

    # Lane-pad the feature axis to a multiple of 128 so the output store is an
    # unmasked lane-dense vst.  Zero padding keeps the moments exact (inv_d = 1/d,
    # analytic variance correction in the kernel) and padded scale/shift are zero.
    d_pad = max(128, ((d + 127) // 128) * 128)
    n_pad = d_pad - d
    if n_pad:
        x2 = jnp.pad(x2, ((0, 0), (0, n_pad)))

    # Params: resident (1, D_pad) f32, cast/padded once in the wrapper.
    scale2 = jnp.pad(scale.astype(jnp.float32).reshape(1, d), ((0, 0), (0, n_pad)))
    shift2 = jnp.pad(shift.astype(jnp.float32).reshape(1, d), ((0, 0), (0, n_pad)))

    vmem_limit = _vmem_limit_bytes()
    if row_block is None:
        row_block = _choose_row_block(rows, d_pad, itemsize, vmem_limit)

    grid = (pl.cdiv(rows, row_block),)          # ragged last block handled by Pallas

    cost = pl.CostEstimate(
        flops=9 * rows * d_pad,                 # moments + normalize + affine (rough)
        transcendentals=rows,                   # one rsqrt per row
        bytes_accessed=rows * d_pad * 2 * itemsize + rows * d * itemsize
        + 2 * d_pad * 4,
    )

    kernel = functools.partial(
        layernorm_kernel, eps=eps, inv_d=1.0 / d, n_pad=n_pad
    )
    out = pl.pallas_call(
        kernel,
        out_shape=jax.ShapeDtypeStruct((rows, d_pad), x.dtype),
        grid_spec=pltpu.PrefetchScalarGridSpec(
            num_scalar_prefetch=0,
            grid=grid,
            in_specs=[
                pl.BlockSpec((row_block, d_pad), lambda i: (i, 0)),
                pl.BlockSpec((1, d_pad), lambda i: (0, 0)),   # scale: resident
                pl.BlockSpec((1, d_pad), lambda i: (0, 0)),   # shift: resident
            ],
            out_specs=pl.BlockSpec((row_block, d_pad), lambda i: (i, 0)),
        ),
        compiler_params=pltpu.CompilerParams(
            # Single grid axis "parallel": no-op on v5e/v6e (1 TC), shards the row
            # blocks across both TensorCores on v7x.
            dimension_semantics=("parallel",),
            vmem_limit_bytes=vmem_limit,
        ),
        cost_estimate=cost,
    )(x2, scale2, shift2)

    if n_pad:
        out = out[:, :d]
    return out.reshape(orig_shape)


def _reference(x, scale, shift, eps=1e-5):
    mean = x.mean(axis=-1, keepdims=True)
    var = ((x - mean) ** 2).mean(axis=-1, keepdims=True)
    return scale * (x - mean) / jnp.sqrt(var + eps) + shift


if __name__ == "__main__":
    key = jax.random.PRNGKey(0)

    # Case 1: lane-dense feature dim (multiple of 128), matching the module's usual use.
    batch, seq, d_embedding = 2, 8, 128
    k1, k2 = jax.random.split(key)
    x = jax.random.normal(k1, (batch, seq, d_embedding), dtype=jnp.float32)
    # Deterministic params matching nn.Parameter(torch.ones/zeros(d_embedding)).
    scale = jnp.ones((d_embedding,), jnp.float32)
    shift = jnp.zeros((d_embedding,), jnp.float32)
    y = layer_norm(x, scale, shift)
    jax.block_until_ready(y)
    assert jnp.allclose(y, _reference(x, scale, shift), atol=1e-5, rtol=1e-5)

    # Case 2: ragged feature dim (exercises the zero-pad-to-128 path; moments must
    # remain exact thanks to inv_d = 1/true_D and the analytic variance correction).
    d_ragged = 96
    x_r = jax.random.normal(k2, (batch, seq, d_ragged), dtype=jnp.float32) + 3.0
    scale_r = jnp.ones((d_ragged,), jnp.float32)
    shift_r = jnp.zeros((d_ragged,), jnp.float32)
    y_r = layer_norm(x_r, scale_r, shift_r)
    jax.block_until_ready(y_r)
    assert jnp.allclose(y_r, _reference(x_r, scale_r, shift_r), atol=1e-5, rtol=1e-5)

    print("KERNEL_OK")
</pallas_src>

<mosaic_0001>
module attributes {stable_mosaic.version = 11 : i64} {
  func.func @layernorm_kernel(%arg0: i32, %arg1: memref<8x128xf32, #tpu.memory_space<vmem>>, %arg2: memref<1x128xf32, #tpu.memory_space<vmem>>, %arg3: memref<1x128xf32, #tpu.memory_space<vmem>>, %arg4: memref<8x128xf32, #tpu.memory_space<vmem>>) attributes {dimension_semantics = [#tpu.dimension_semantics<parallel>], iteration_bounds = array<i64: 2>, scalar_prefetch = 0 : i64, scratch_operands = 0 : i64, tpu.core_type = #tpu.core_type<tc>, window_params = [{transform_indices = @transform_0, window_bounds = array<i64: 8, 128>}, {pipeline_mode = #tpu.pipeline_mode<synchronous>, transform_indices = @transform_1, window_bounds = array<i64: 1, 128>}, {pipeline_mode = #tpu.pipeline_mode<synchronous>, transform_indices = @transform_2, window_bounds = array<i64: 1, 128>}, {transform_indices = @transform_3, window_bounds = array<i64: 8, 128>}]} {
    %c0 = arith.constant 0 : index
    %c0_0 = arith.constant 0 : index
    %0 = vector.load %arg1[%c0, %c0_0] : memref<8x128xf32, #tpu.memory_space<vmem>>, vector<8x128xf32>
    %cst = arith.constant dense<0.000000e+00> : vector<8xf32>
    %1 = vector.multi_reduction <add>, %0, %cst [1] : vector<8x128xf32> to vector<8xf32>
    %2 = vector.shape_cast %1 : vector<8xf32> to vector<8x1xf32>
    %cst_1 = arith.constant 7.812500e-03 : f32
    %3 = vector.broadcast %cst_1 : f32 to vector<8x1xf32>
    %4 = arith.mulf %2, %3 : vector<8x1xf32>
    %5 = vector.broadcast %4 : vector<8x1xf32> to vector<8x128xf32>
    %6 = arith.subf %0, %5 : vector<8x128xf32>
    %7 = arith.mulf %6, %6 : vector<8x128xf32>
    %cst_2 = arith.constant dense<0.000000e+00> : vector<8xf32>
    %8 = vector.multi_reduction <add>, %7, %cst_2 [1] : vector<8x128xf32> to vector<8xf32>
    %9 = vector.shape_cast %8 : vector<8xf32> to vector<8x1xf32>
    %cst_3 = arith.constant 7.812500e-03 : f32
    %10 = vector.broadcast %cst_3 : f32 to vector<8x1xf32>
    %11 = arith.mulf %9, %10 : vector<8x1xf32>
    %cst_4 = arith.constant 0.000000e+00 : f32
    %12 = vector.broadcast %cst_4 : f32 to vector<8x1xf32>
    %13 = arith.maximumf %11, %12 : vector<8x1xf32>
    %cst_5 = arith.constant 9.99999974E-6 : f32
    %14 = vector.broadcast %cst_5 : f32 to vector<8x1xf32>
    %15 = arith.addf %13, %14 : vector<8x1xf32>
    %16 = math.rsqrt %15 : vector<8x1xf32>
    %17 = vector.broadcast %16 : vector<8x1xf32> to vector<8x128xf32>
    %18 = arith.mulf %6, %17 : vector<8x128xf32>
    %c0_6 = arith.constant 0 : index
    %c0_7 = arith.constant 0 : index
    %19 = vector.load %arg2[%c0_6, %c0_7] : memref<1x128xf32, #tpu.memory_space<vmem>>, vector<1x128xf32>
    %20 = vector.broadcast %19 : vector<1x128xf32> to vector<8x128xf32>
    %21 = arith.mulf %18, %20 : vector<8x128xf32>
    %c0_8 = arith.constant 0 : index
    %c0_9 = arith.constant 0 : index
    %22 = vector.load %arg3[%c0_8, %c0_9] : memref<1x128xf32, #tpu.memory_space<vmem>>, vector<1x128xf32>
    %23 = vector.broadcast %22 : vector<1x128xf32> to vector<8x128xf32>
    %24 = arith.addf %21, %23 : vector<8x128xf32>
    %c0_10 = arith.constant 0 : index
    %c0_11 = arith.constant 0 : index
    %25 = vector.load %arg4[%c0_10, %c0_11] : memref<8x128xf32, #tpu.memory_space<vmem>>, vector<8x128xf32>
    tpu.vector_store %arg4[%c0_10, %c0_11], %24 {strides = array<i32>} : memref<8x128xf32, #tpu.memory_space<vmem>>, vector<8x128xf32>,
    return
  }
  func.func @transform_0(%arg0: i32) -> (i32, i32) {
    %c0_i32 = arith.constant 0 : i32
    %c0_i32_0 = arith.constant 0 : i32
    return %arg0, %c0_i32 : i32, i32
  }
  func.func @transform_1(%arg0: i32) -> (i32, i32) {
    %c0_i32 = arith.constant 0 : i32
    %c0_i32_0 = arith.constant 0 : i32
    %c0_i32_1 = arith.constant 0 : i32
    return %c0_i32, %c0_i32_0 : i32, i32
  }
  func.func @transform_2(%arg0: i32) -> (i32, i32) {
    %c0_i32 = arith.constant 0 : i32
    %c0_i32_0 = arith.constant 0 : i32
    %c0_i32_1 = arith.constant 0 : i32
    return %c0_i32, %c0_i32_0 : i32, i32
  }
  func.func @transform_3(%arg0: i32) -> (i32, i32) {
    %c0_i32 = arith.constant 0 : i32
    %c0_i32_0 = arith.constant 0 : i32
    return %arg0, %c0_i32 : i32, i32
  }
}

</mosaic_0001>

<llo_original>
// kernel: tpu_custom_call.1
$region0: #{tpu_custom_call.1}
  #allocation0 [shape = 'u32[]', space=smem, size = 0x4, offset = 0x4, fixed_abs, tag = 'smem constant byte address 0x4 - core index']
  #allocation1 [shape = 'u32[144,128]{1,0:T(1,128)}', space=vmem, size = 0x12000, scoped, tag = 'internal scratch']
  %s0 = inlined_call_operand.hbm [shape: f32[16,128], index: 0, kind: input, shape index: {}]
  %s1 = inlined_call_operand.hbm [shape: f32[1,128], index: 1, kind: input, shape index: {}]
  %s2 = inlined_call_operand.hbm [shape: f32[1,128], index: 2, kind: input, shape index: {}]
  %s3 = inlined_call_operand.hbm [shape: f32[16,128], index: 3, kind: output, shape index: {}]
  %s4 = sld [smem:[#allocation0]]
  $region57: #{tpu_custom_call.1} parent=0
    _
  %s6 = ssub.s32 1, %s4
  %s7 = scalar_select 0, %s6, %s4
  $region1: #{tpu_custom_call.1} parent=0
    #allocation2 [shape = 'u8[8192]{0}', space=vmem, size = 0x2000, scoped, tag = 'input window, operand 0']
    #allocation3 [shape = 's32[2]{0}', space=sflag, size = 0x8, scoped, tag = 'scoped memory for tpu_custom_call.1']
    #allocation4 [shape = 's32[2]{0}', space=sflag, size = 0x8, scoped, tag = 'scoped memory for tpu_custom_call.1']
    #allocation5 [shape = 'u8[512]{0}', space=vmem, size = 0x400, scoped, tag = 'input window, operand 1, single buffered']
    #allocation6 [shape = 's32[1]{0}', space=sflag, size = 0x4, scoped, tag = 'scoped memory for tpu_custom_call.1']
    #allocation7 [shape = 'u8[512]{0}', space=vmem, size = 0x400, scoped, tag = 'input window, operand 2, single buffered']
    #allocation8 [shape = 'u8[8192]{0}', space=vmem, size = 0x2000, scoped, tag = 'output window, operand 0']
    %8 = vsyncpa [#allocation3], 0
    %s9 = scalar_lea.sflag [#allocation3], 1
    %10 = vsyncpa %s9, 0
    %11 = vsyncpa [#allocation6], 0
    %12 = vsyncpa [#allocation4], 0
    %s13 = scalar_lea.sflag [#allocation4], 1
    %14 = vsyncpa %s13, 0
    loop: start=0, step=1, limit=4
    $region2: #{tpu_custom_call.1} parent=1 // loop_pre_header
      _
    $region3: #{tpu_custom_call.1} parent=1 // loop_header
      %s16 = sphi 0, %s20
      %p17 = scmp.ge.s32.totalorder %s16, 4
      %s26 = sphi 0, %s28
      %s29 = sphi 0, %s26
      %s30 = sphi 0, %s29
      %s46 = sphi 0, %s30
      %s50 = sphi 0, %s50
      %s52 = sphi 0, %s50
      %s53 = sphi 0, %s52
      %s67 = sphi 0, %s53
      %s71 = sphi 0, %s71
      %s73 = sphi 0, %s71
      %s74 = sphi 0, %s73
      %s88 = sphi 0, %s74
      %s94 = sphi 0, %s96
      %s97 = sphi 0, %s94
      %s98 = sphi 0, %s97
      %s114 = sphi 0, %s98
    $region4: #{tpu_custom_call.1} parent=1 // loop_header_branch
      %19 = sbr.rel (%p17) target = $region8
    $region5: #{tpu_custom_call.1} parent=1 // loop_body
      %s21 = ssub.s32 %s16, 1
      %s22 = ssub.s32 %s16, 2
      %s23 = sadd.s32 %s16, 1
      %s24 = ssub.s32 %s16, %s23
      %p25 = scmp.eq.s32.totalorder %s24, 0
      %s27 = sadd.s32 %s26, 1
      %s28 = scalar_select %p25, %s26, %s27
      %p31 = pneg %p25
      %p32 = scmp.eq.s32.totalorder %s16, 1
      %p33 = por %p31, %p32
      %p34 = scmp.ne.s32.totalorder %s26, %s29
      %p35 = scmp.eq.s32.totalorder %s16, 0
      %p36 = por %p34, %p35
      %p37 = scmp.ne.s32.totalorder %s26, %s29
      %p38 = scmp.eq.s32.totalorder %s21, 1
      %p39 = por %p37, %p38
      %p40 = scmp.ne.s32.totalorder %s29, %s30
      %p41 = scmp.eq.s32.totalorder %s21, 0
      %p42 = por %p40, %p41
      %p43 = scmp.ne.s32.totalorder %s29, %s30
      %p44 = scmp.eq.s32.totalorder %s22, 1
      %p45 = por %p43, %p44
      %p47 = scmp.ne.s32.totalorder %s30, %s46
      %p48 = scmp.eq.s32.totalorder %s22, 0
      %p49 = por %p47, %p48
      %s51 = sadd.s32 %s50, 1
      %p54 = scmp.eq.s32.totalorder %s16, 1
      %p55 = scmp.ne.s32.totalorder %s50, %s52
      %p56 = scmp.eq.s32.totalorder %s16, 0
      %p57 = por %p55, %p56
      %p58 = scmp.ne.s32.totalorder %s50, %s52
      %p59 = scmp.eq.s32.totalorder %s21, 1
      %p60 = por %p58, %p59
      %p61 = scmp.ne.s32.totalorder %s52, %s53
      %p62 = scmp.eq.s32.totalorder %s21, 0
      %p63 = por %p61, %p62
      %p64 = scmp.ne.s32.totalorder %s52, %s53
      %p65 = scmp.eq.s32.totalorder %s22, 1
      %p66 = por %p64, %p65
      %p68 = scmp.ne.s32.totalorder %s53, %s67
      %p69 = scmp.eq.s32.totalorder %s22, 0
      %p70 = por %p68, %p69
      %s72 = sadd.s32 %s71, 1
      %p75 = scmp.eq.s32.totalorder %s16, 1
      %p76 = scmp.ne.s32.totalorder %s71, %s73
      %p77 = scmp.eq.s32.totalorder %s16, 0
      %p78 = por %p76, %p77
      %p79 = scmp.ne.s32.totalorder %s71, %s73
      %p80 = scmp.eq.s32.totalorder %s21, 1
      %p81 = por %p79, %p80
      %p82 = scmp.ne.s32.totalorder %s73, %s74
      %p83 = scmp.eq.s32.totalorder %s21, 0
      %p84 = por %p82, %p83
      %p85 = scmp.ne.s32.totalorder %s73, %s74
      %p86 = scmp.eq.s32.totalorder %s22, 1
      %p87 = por %p85, %p86
      %p89 = scmp.ne.s32.totalorder %s74, %s88
      %p90 = scmp.eq.s32.totalorder %s22, 0
      %p91 = por %p89, %p90
      %s92 = ssub.s32 %s16, %s23
      %p93 = scmp.eq.s32.totalorder %s92, 0
      %s95 = sadd.s32 %s94, 1
      %s96 = scalar_select %p93, %s94, %s95
      %p99 = pneg %p93
      %p100 = scmp.eq.s32.totalorder %s16, 1
      %p101 = por %p99, %p100
      %p102 = scmp.ne.s32.totalorder %s94, %s97
      %p103 = scmp.eq.s32.totalorder %s16, 0
      %p104 = por %p102, %p103
      %p105 = scmp.ne.s32.totalorder %s94, %s97
      %p106 = scmp.eq.s32.totalorder %s21, 1
      %p107 = por %p105, %p106
      %p108 = scmp.ne.s32.totalorder %s97, %s98
      %p109 = scmp.eq.s32.totalorder %s21, 0
      %p110 = por %p108, %p109
      %p111 = scmp.ne.s32.totalorder %s97, %s98
      %p112 = scmp.eq.s32.totalorder %s22, 1
      %p113 = por %p111, %p112
      %p115 = scmp.ne.s32.totalorder %s98, %s114
      %p116 = scmp.eq.s32.totalorder %s22, 0
      %p117 = por %p115, %p116
      %p118 = scmp.le.s32.totalorder 1, %s16
      %p119 = scmp.lt.s32.totalorder %s16, 3
      %p120 = pnand %p118, %p119
      %p121 = pneg %p120
      // Predicated region
      $region9: #{tpu_custom_call.1} parent=5 // pred_check
        _
      $region10: #{tpu_custom_call.1} parent=5 // pred_check_branch
        %123 = sbr.rel (%p120) target = $region12
      $region11: #{tpu_custom_call.1} parent=5 // pred_region
        %s124 = ssub.s32 %s16, 1
        // Predicated region
        $region13: #{tpu_custom_call.1} parent=11 // pred_check
          %p125 = pneg %p63
        $region14: #{tpu_custom_call.1} parent=11 // pred_check_branch
          %127 = sbr.rel (%p125) target = $region16
        $region15: #{tpu_custom_call.1} parent=11 // pred_region
          %s129 = ssub.s32 16, 16
          %130 = vsyncadd [#allocation6], %s129
          %s132 = sshll.u32 [#allocation5], 4
          %s133 = int_to_ptr.vmem [resolvable:$true] %s132
          %135 = dma.hbm_to_vmem [thread:$0]  %s1, 16, %s133, [#allocation6]
        $region16: #{tpu_custom_call.1} parent=11 // pred_fallthru
          _
        // Predicated region
        $region17: #{tpu_custom_call.1} parent=11 // pred_check
          %p136 = pneg %p84
        $region18: #{tpu_custom_call.1} parent=11 // pred_check_branch
          %138 = sbr.rel (%p136) target = $region20
        $region19: #{tpu_custom_call.1} parent=11 // pred_region
          %s140 = ssub.s32 16, 16
          %141 = vsyncadd [#allocation6], %s140
          %s143 = sshll.u32 [#allocation7], 4
          %s144 = int_to_ptr.vmem [resolvable:$true] %s143
          %146 = dma.hbm_to_vmem [thread:$0]  %s2, 16, %s144, [#allocation6]
        $region20: #{tpu_custom_call.1} parent=11 // pred_fallthru
          _
      $region12: #{tpu_custom_call.1} parent=5 // pred_fallthru
        _
      %p147 = scmp.lt.s32.totalorder %s16, 2
      // Predicated region
      $region21: #{tpu_custom_call.1} parent=5 // pred_check
        %p148 = pneg %p147
      $region22: #{tpu_custom_call.1} parent=5 // pred_check_branch
        %150 = sbr.rel (%p148) target = $region24
      $region23: #{tpu_custom_call.1} parent=5 // pred_region
        // Predicated region
        $region25: #{tpu_custom_call.1} parent=23 // pred_check
          %p151 = pneg %p36
        $region26: #{tpu_custom_call.1} parent=23 // pred_check_branch
          %153 = sbr.rel (%p151) target = $region28
        $region27: #{tpu_custom_call.1} parent=23 // pred_region
          %s154 = sand.u32 %s26, 1
          %s155 = scalar_lea.sflag [#allocation3], %s154
          %s156 = sand.u32 %s26, 1
          %s157 = smul.addr %s156, 8
          %s158 = scalar_lea.vmem [#allocation2], %s157
          %s160 = ssub.s32 128, 128
          %161 = vsyncadd %s155, %s160
          %s162 = smul.addr %s16, 128
          %s163 = scalar_lea.hbm %s0, %s162
          %s165 = sshll.u32 %s158, 4
          %s166 = int_to_ptr.vmem [resolvable:$true] %s165
          %168 = dma.hbm_to_vmem [thread:$0]  %s163, 128, %s166, %s155
        $region28: #{tpu_custom_call.1} parent=23 // pred_fallthru
          _
      $region24: #{tpu_custom_call.1} parent=5 // pred_fallthru
        _
      %p169 = scmp.le.s32.totalorder 1, %s16
      %p170 = scmp.lt.s32.totalorder %s16, 3
      %p171 = pnand %p169, %p170
      %p172 = pneg %p171
      // Predicated region
      $region29: #{tpu_custom_call.1} parent=5 // pred_check
        _
      $region30: #{tpu_custom_call.1} parent=5 // pred_check_branch
        %174 = sbr.rel (%p171) target = $region32
      $region31: #{tpu_custom_call.1} parent=5 // pred_region
        %s175 = ssub.s32 %s16, 1
        %s176 = sand.u32 %s29, 1
        %s177 = scalar_lea.sflag [#allocation3], %s176
        %s178 = sand.u32 %s29, 1
        %s179 = smul.addr %s178, 8
        %s180 = scalar_lea.vmem [#allocation2], %s179
        // Predicated region
        $region33: #{tpu_custom_call.1} parent=31 // pred_check
          %p181 = pneg %p42
        $region34: #{tpu_custom_call.1} parent=31 // pred_check_branch
          %183 = sbr.rel (%p181) target = $region36
        $region35: #{tpu_custom_call.1} parent=31 // pred_region
          %184 = dma.done %s177, 128
        $region36: #{tpu_custom_call.1} parent=31 // pred_fallthru
          _
        // Predicated region
        $region37: #{tpu_custom_call.1} parent=31 // pred_check
          %p185 = pneg %p63
        $region38: #{tpu_custom_call.1} parent=31 // pred_check_branch
          %187 = sbr.rel (%p185) target = $region40
        $region39: #{tpu_custom_call.1} parent=31 // pred_region
          %188 = dma.done [#allocation6], 16
        $region40: #{tpu_custom_call.1} parent=31 // pred_fallthru
          _
        // Predicated region
        $region41: #{tpu_custom_call.1} parent=31 // pred_check
          %p189 = pneg %p84
        $region42: #{tpu_custom_call.1} parent=31 // pred_check_branch
          %191 = sbr.rel (%p189) target = $region44
        $region43: #{tpu_custom_call.1} parent=31 // pred_region
          %192 = dma.done [#allocation6], 16
        $region44: #{tpu_custom_call.1} parent=31 // pred_fallthru
          _
        %s193 = sand.u32 %s29, 1
        %s194 = scalar_lea.sflag [#allocation3], %s193
        %s195 = sand.u32 %s29, 1
        %s196 = smul.addr %s195, 8
        %s197 = scalar_lea.vmem [#allocation2], %s196
        %p198 = pneg %p42
        %p199 = pneg %p39
        %p200 = pneg %p63
        %p201 = pneg %p60
        %p202 = pneg %p84
        %p203 = pneg %p81
        %p204 = pneg %p110
        %p205 = pneg %p107
        %s206 = sand.u32 %s97, 1
        %s207 = scalar_lea.sflag [#allocation4], %s206
        %s208 = sand.u32 %s97, 1
        %s209 = smul.addr %s208, 8
        %s210 = scalar_lea.vmem [#allocation8], %s209
        %v211 = vld [vmem:[%s180] sm:$0xff]
        %212 = vadd.xlane.f32.xlu0 %v211
        %v213 = vpop.xlane.xlu0 %212
        %v214 = vmul.f32 %v213, 0.0078125
        %v215 = vsub.f32 %v211, %v214
        %v216 = vmul.f32 %v215, %v215
        %217 = vadd.xlane.f32.xlu0 %v216
        %v218 = vpop.xlane.xlu0 %217
        %v219 = vmul.f32 %v218, 0.0078125
        %v220 = vmax.f32 %v219, 0.0
        %v221 = vadd.f32 %v220, 1e-05
        %v222 = vrsqrt.pop %v221
        %v223 = vmul.f32 %v215, %v222
        %v224 = vld [vmem:[#allocation5] sm:$0x1]
        %v226 = vlaneseq
        %v227 = vshrl.u32 %v226, 7
        %v228 = vsub.s32 0, %v227
        %v229 = vrot.slane %v224, %v228
        %v231 = vmul.f32 %v223, %v229
        %v232 = vld [vmem:[#allocation7] sm:$0x1]
        %v234 = vlaneseq
        %v235 = vshrl.u32 %v234, 7
        %v236 = vsub.s32 0, %v235
        %v237 = vrot.slane %v232, %v236
        %v239 = vadd.f32 %v231, %v237
        %240 = vst [vmem:[%s210] sm:$0xff] %v239
        %s241 = sand.u32 %s97, 1
        %s242 = scalar_lea.sflag [#allocation4], %s241
        %s243 = sand.u32 %s97, 1
        %s244 = smul.addr %s243, 8
        %s245 = scalar_lea.vmem [#allocation8], %s244
        // Predicated region
        $region45: #{tpu_custom_call.1} parent=31 // pred_check
          %p246 = pneg %p107
        $region46: #{tpu_custom_call.1} parent=31 // pred_check_branch
          %248 = sbr.rel (%p246) target = $region48
        $region47: #{tpu_custom_call.1} parent=31 // pred_region
          %s250 = ssub.s32 128, 128
          %251 = vsyncadd %s242, %s250
          %s252 = smul.addr %s21, 128
          %s253 = scalar_lea.hbm %s3, %s252
          %s255 = sshll.u32 %s245, 4
          %s256 = int_to_ptr.vmem [resolvable:$true] %s255
          %258 = dma.vmem_to_hbm [thread:$0]  %s256, 128, %s253, %s242
        $region48: #{tpu_custom_call.1} parent=31 // pred_fallthru
          _
      $region32: #{tpu_custom_call.1} parent=5 // pred_fallthru
        _
      %p259 = scmp.le.s32.totalorder 2, %s16
      // Predicated region
      $region49: #{tpu_custom_call.1} parent=5 // pred_check
        %p260 = pneg %p259
      $region50: #{tpu_custom_call.1} parent=5 // pred_check_branch
        %262 = sbr.rel (%p260) target = $region52
      $region51: #{tpu_custom_call.1} parent=5 // pred_region
        %s263 = ssub.s32 %s16, 2
        // Predicated region
        $region53: #{tpu_custom_call.1} parent=51 // pred_check
          %p264 = pneg %p113
        $region54: #{tpu_custom_call.1} parent=51 // pred_check_branch
          %266 = sbr.rel (%p264) target = $region56
        $region55: #{tpu_custom_call.1} parent=51 // pred_region
          %s267 = sand.u32 %s98, 1
          %s268 = scalar_lea.sflag [#allocation4], %s267
          %s269 = sand.u32 %s98, 1
          %s270 = smul.addr %s269, 8
          %s271 = scalar_lea.vmem [#allocation8], %s270
          %272 = dma.done %s268, 128
        $region56: #{tpu_custom_call.1} parent=51 // pred_fallthru
          _
      $region52: #{tpu_custom_call.1} parent=5 // pred_fallthru
        _
    $region6: #{tpu_custom_call.1} parent=1 // loop_footer
      %s20 = sadd.s32 1, %s16
    $region7: #{tpu_custom_call.1} parent=1 // loop_footer_branch
      %15 = sbr.rel target = $region3
    $region8: #{tpu_custom_call.1} parent=1 // loop_exit
      _
    %273 = vsyncpa [#allocation3], 1
    %s274 = scalar_lea.sflag [#allocation3], 1
    %275 = vsyncpa %s274, 1
    %276 = vsyncpa [#allocation6], 1
    %277 = vsyncpa [#allocation4], 1
    %s278 = scalar_lea.sflag [#allocation4], 1
    %279 = vsyncpa %s278, 1

</llo_original>
